<compile_context>
chip_gen: v5e
topology: v5e:2x2
jax: 0.10.0
libtpu: 0.0.40
codegen_flags: <defaults>
</compile_context>

<pallas_src>
import functools

import jax
import jax.numpy as jnp
from jax import lax
from jax.experimental import pallas as pl
from jax.experimental.pallas import tpu as pltpu


def _tpu_defaults():
    """Best-effort hardware query with conservative, safe-everywhere fallbacks."""
    vmem_bytes = None
    n_cores = None
    try:
        info = pltpu.get_tpu_info()
        vmem_bytes = getattr(info, "vmem_capacity_bytes", None)
        for name in ("num_tensorcores", "tensorcore_count", "num_cores", "core_count"):
            val = getattr(info, name, None)
            if isinstance(val, int) and val > 0:
                n_cores = val
                break
    except Exception:
        pass
    if vmem_bytes is not None and vmem_bytes >= 96 * 1024 * 1024:
        # v5e / v6e (128 MiB VMEM): larger blocks amortize per-step overhead.
        target_block_bytes = 16 << 20
        vmem_limit_bytes = 64 << 20
    else:
        # v7x (64 MiB / TC) or unknown: stay conservative.
        target_block_bytes = 4 << 20
        vmem_limit_bytes = 32 << 20
    n_splits = n_cores if n_cores in (1, 2) else 1
    return n_splits, target_block_bytes, vmem_limit_bytes


def _tv_kernel(x_ref, h_acc_ref, w_acc_ref, *, g, bc, strip, n_strips,
               blocks_per_split, ragged):
    """x_ref: (bc, H, KW) tile of folded images; accumulators: (1, H, KW)."""
    j = pl.program_id(1)  # inner ("arbitrary") accumulation axis

    @pl.when(j == 0)
    def _():
        h_acc_ref[...] = jnp.zeros_like(h_acc_ref)
        w_acc_ref[...] = jnp.zeros_like(w_acc_ref)

    _, h, kw = x_ref.shape
    # Nominal (unclamped) global block index -> used only for tail masking.
    block_start = (pl.program_id(0) * blocks_per_split + j) * bc

    def strip_sq_sums(off):
        xs = x_ref[pl.ds(off, strip)].astype(jnp.float32)        # (strip, H, KW)
        if ragged:
            # Mask images beyond the real image count (covers both the partial
            # last block and fully-out-of-range, clamped duplicate blocks).
            img = block_start + off + lax.broadcasted_iota(jnp.int32, (strip, 1, 1), 0)
            xs = jnp.where(img < g, xs, 0.0)
        # Next-row / next-lane differences via XLU rotations (jnp.roll semantics:
        # shift = size-1 brings element i+1 to position i).  The wraparound
        # entries land in the last row / last lane-of-each-image and are
        # excluded by the wrapper-side reduction -> no in-kernel boundary mask.
        dh = pltpu.roll(xs, shift=h - 1, axis=1) - xs
        dw = pltpu.roll(xs, shift=kw - 1, axis=2) - xs
        # Reduce only along the leading (non-sublane/lane) axis: vreg-wise adds.
        return jnp.sum(dh * dh, axis=0), jnp.sum(dw * dw, axis=0)

    if n_strips == 1:
        hp, wp = strip_sq_sums(0)
    else:
        def body(i, carry):
            hp_c, wp_c = carry
            off = pl.multiple_of(i * strip, strip)
            dh2, dw2 = strip_sq_sums(off)
            return hp_c + dh2, wp_c + dw2

        zeros = jnp.zeros((h, kw), jnp.float32)
        hp, wp = lax.fori_loop(0, n_strips, body, (zeros, zeros),
                               unroll=True if n_strips <= 8 else 8)

    h_acc_ref[0] += hp
    w_acc_ref[0] += wp


def tv_loss(x, tv_loss_weight: float = 1.0, *, n_splits=None,
            target_block_bytes=None, vmem_limit_bytes=None):
    """Exact equivalent of TVLoss.forward for NCHW input x."""
    n, c, h, w = x.shape
    nc = n * c
    itemsize = jnp.dtype(x.dtype).itemsize

    auto_splits, auto_block_bytes, auto_vmem = _tpu_defaults()
    if n_splits is None:
        n_splits = auto_splits
    if target_block_bytes is None:
        target_block_bytes = auto_block_bytes
    if vmem_limit_bytes is None:
        vmem_limit_bytes = auto_vmem

    # ---- lane folding: pack k = 128 // W images into the lane axis (W < 128).
    k = max(1, min(nc, 128 // w)) if w < 128 else 1
    if k > 1:
        g = int(pl.cdiv(nc, k))
        x_flat = x.reshape(nc, h, w)
        pad = g * k - nc
        if pad:
            # Tiny (< k images); fused by XLA into the relayout pass below.
            x_flat = jnp.concatenate(
                [x_flat, jnp.zeros((pad, h, w), x.dtype)], axis=0)
        x_in = (x_flat.reshape(g, k, h, w)
                      .transpose(0, 2, 1, 3)
                      .reshape(g, h, k * w))
    else:
        g = nc
        x_in = x.reshape(nc, h, w)
    kw = k * w

    # ---- block sizing (bounded by per-split image count and a VMEM budget).
    bytes_per_img = h * kw * itemsize
    per_split = int(pl.cdiv(g, n_splits))
    bc = int(max(1, min(per_split, target_block_bytes // bytes_per_img)))
    if bc >= 8:
        bc = (bc // 8) * 8          # multiple of the reduction strip
    strip = min(bc, 8)
    n_strips = bc // strip          # exact by construction
    num_blocks = int(pl.cdiv(g, bc))
    blocks_per_split = int(pl.cdiv(num_blocks, n_splits))
    ragged = (n_splits * blocks_per_split * bc) != g

    # TODO(synk): for very large H*W additionally tile over H (carrying the
    # previous tile's last row); one image per block is the current floor.

    if ragged:
        # Clamp so every DMA stays in bounds; duplicate/overrun blocks are
        # fully masked inside the kernel and contribute exactly 0.
        in_map = lambda s, j, bps=blocks_per_split, nb=num_blocks: (
            jnp.minimum(s * bps + j, nb - 1), 0, 0)
    else:
        in_map = lambda s, j, bps=blocks_per_split: (s * bps + j, 0, 0)

    kernel = functools.partial(
        _tv_kernel, g=g, bc=bc, strip=strip, n_strips=n_strips,
        blocks_per_split=blocks_per_split, ragged=ragged)

    cost = pl.CostEstimate(
        flops=6 * g * h * kw,
        transcendentals=0,
        bytes_accessed=g * h * kw * itemsize + 2 * n_splits * h * kw * 4,
    )

    h_out, w_out = pl.pallas_call(
        kernel,
        out_shape=(
            jax.ShapeDtypeStruct((n_splits, h, kw), jnp.float32),
            jax.ShapeDtypeStruct((n_splits, h, kw), jnp.float32),
        ),
        grid_spec=pltpu.PrefetchScalarGridSpec(
            num_scalar_prefetch=0,
            grid=(n_splits, blocks_per_split),
            in_specs=[pl.BlockSpec((bc, h, kw), in_map)],
            out_specs=[
                pl.BlockSpec((1, h, kw), lambda s, j: (s, 0, 0)),
                pl.BlockSpec((1, h, kw), lambda s, j: (s, 0, 0)),
            ],
        ),
        compiler_params=pltpu.CompilerParams(
            dimension_semantics=("parallel", "arbitrary"),
            vmem_limit_bytes=int(vmem_limit_bytes),
        ),
        cost_estimate=cost,
    )(x_in)

    # Tiny final reductions: drop the roll-wraparound last row, and the last
    # column of every folded image (which also removes cross-image columns).
    h_tv = jnp.sum(h_out[:, :h - 1, :])
    w_tv = jnp.sum(w_out.reshape(n_splits, h, k, w)[..., :w - 1])

    # Matches the PyTorch formula (H==1 or W==1 divides by zero, as in torch).
    count_h = c * (h - 1) * w
    count_w = c * h * (w - 1)
    return tv_loss_weight * 2.0 * (h_tv / count_h + w_tv / count_w) / n


def tv_loss_ref(x, tv_loss_weight: float = 1.0):
    """Pure-JAX reference (mirrors the PyTorch forward)."""
    n, c, h, w = x.shape
    count_h = c * (h - 1) * w
    count_w = c * h * (w - 1)
    h_tv = jnp.sum((x[:, :, 1:, :] - x[:, :, :-1, :]) ** 2)
    w_tv = jnp.sum((x[:, :, :, 1:] - x[:, :, :, :-1]) ** 2)
    return tv_loss_weight * 2.0 * (h_tv / count_h + w_tv / count_w) / n


if __name__ == "__main__":
    key = jax.random.PRNGKey(0)
    x = jax.random.normal(key, (2, 4, 16, 16), dtype=jnp.float32)  # NCHW

    fn = jax.jit(functools.partial(tv_loss, tv_loss_weight=1.0))
    out = jax.block_until_ready(fn(x))

    ref = tv_loss_ref(x, 1.0)
    assert jnp.allclose(out, ref, rtol=1e-5, atol=1e-5), (out, ref)

    print("KERNEL_OK")
</pallas_src>

<mosaic_0001>
module attributes {stable_mosaic.version = 11 : i64} {
  func.func @_tv_kernel(%arg0: i32, %arg1: i32, %arg2: memref<1x16x128xf32, #tpu.memory_space<vmem>>, %arg3: memref<1x16x128xf32, #tpu.memory_space<vmem>>, %arg4: memref<1x16x128xf32, #tpu.memory_space<vmem>>) attributes {dimension_semantics = [#tpu.dimension_semantics<parallel>, #tpu.dimension_semantics<arbitrary>], iteration_bounds = array<i64: 1, 1>, scalar_prefetch = 0 : i64, scratch_operands = 0 : i64, tpu.core_type = #tpu.core_type<tc>, window_params = [{transform_indices = @transform_0, window_bounds = array<i64: 1, 16, 128>}, {transform_indices = @transform_1, window_bounds = array<i64: 1, 16, 128>}, {transform_indices = @transform_2, window_bounds = array<i64: 1, 16, 128>}]} {
    %c0_i32 = arith.constant 0 : i32
    %0 = arith.cmpi eq, %arg1, %c0_i32 : i32
    %1 = arith.extui %0 : i1 to i32
    %c0_i32_0 = arith.constant 0 : i32
    %2 = arith.cmpi ne, %1, %c0_i32_0 : i32
    scf.if %2 {
      %cst_16 = arith.constant 0.000000e+00 : f32
      %24 = vector.broadcast %cst_16 : f32 to vector<1x16x128xf32>
      %c0_17 = arith.constant 0 : index
      %c0_18 = arith.constant 0 : index
      %c0_19 = arith.constant 0 : index
      %25 = vector.load %arg3[%c0_17, %c0_18, %c0_19] : memref<1x16x128xf32, #tpu.memory_space<vmem>>, vector<1x16x128xf32>
      tpu.vector_store %arg3[%c0_17, %c0_18, %c0_19], %24 {strides = array<i32>} : memref<1x16x128xf32, #tpu.memory_space<vmem>>, vector<1x16x128xf32>,
      %cst_20 = arith.constant 0.000000e+00 : f32
      %26 = vector.broadcast %cst_20 : f32 to vector<1x16x128xf32>
      %c0_21 = arith.constant 0 : index
      %c0_22 = arith.constant 0 : index
      %c0_23 = arith.constant 0 : index
      %27 = vector.load %arg4[%c0_21, %c0_22, %c0_23] : memref<1x16x128xf32, #tpu.memory_space<vmem>>, vector<1x16x128xf32>
      tpu.vector_store %arg4[%c0_21, %c0_22, %c0_23], %26 {strides = array<i32>} : memref<1x16x128xf32, #tpu.memory_space<vmem>>, vector<1x16x128xf32>,
    } else {
    }
    %c0 = arith.constant 0 : index
    %c0_1 = arith.constant 0 : index
    %c0_2 = arith.constant 0 : index
    %3 = vector.load %arg2[%c0, %c0_1, %c0_2] : memref<1x16x128xf32, #tpu.memory_space<vmem>>, vector<1x16x128xf32>
    %c15_i32 = arith.constant 15 : i32
    %4 = tpu.dynamic_rotate %3 by %c15_i32 dim 1 : vector<1x16x128xf32>, i32 -> vector<1x16x128xf32>
    %5 = arith.subf %4, %3 : vector<1x16x128xf32>
    %c127_i32 = arith.constant 127 : i32
    %6 = tpu.dynamic_rotate %3 by %c127_i32 dim 2 : vector<1x16x128xf32>, i32 -> vector<1x16x128xf32>
    %7 = arith.subf %6, %3 : vector<1x16x128xf32>
    %8 = arith.mulf %5, %5 : vector<1x16x128xf32>
    %cst = arith.constant dense<0.000000e+00> : vector<16x128xf32>
    %9 = vector.multi_reduction <add>, %8, %cst [0] : vector<1x16x128xf32> to vector<16x128xf32>
    %10 = arith.mulf %7, %7 : vector<1x16x128xf32>
    %cst_3 = arith.constant dense<0.000000e+00> : vector<16x128xf32>
    %11 = vector.multi_reduction <add>, %10, %cst_3 [0] : vector<1x16x128xf32> to vector<16x128xf32>
    %c0_4 = arith.constant 0 : index
    %c0_5 = arith.constant 0 : index
    %c0_6 = arith.constant 0 : index
    %12 = vector.load %arg3[%c0_4, %c0_5, %c0_6] : memref<1x16x128xf32, #tpu.memory_space<vmem>>, vector<1x16x128xf32>
    %13 = vector.shape_cast %12 : vector<1x16x128xf32> to vector<16x128xf32>
    %14 = arith.addf %13, %9 : vector<16x128xf32>
    %c0_7 = arith.constant 0 : index
    %c0_8 = arith.constant 0 : index
    %c0_9 = arith.constant 0 : index
    %15 = vector.load %arg3[%c0_7, %c0_8, %c0_9] : memref<1x16x128xf32, #tpu.memory_space<vmem>>, vector<1x16x128xf32>
    %16 = vector.shape_cast %15 : vector<1x16x128xf32> to vector<16x128xf32>
    %17 = vector.shape_cast %14 : vector<16x128xf32> to vector<1x16x128xf32>
    tpu.vector_store %arg3[%c0_7, %c0_8, %c0_9], %17 {strides = array<i32>} : memref<1x16x128xf32, #tpu.memory_space<vmem>>, vector<1x16x128xf32>,
    %c0_10 = arith.constant 0 : index
    %c0_11 = arith.constant 0 : index
    %c0_12 = arith.constant 0 : index
    %18 = vector.load %arg4[%c0_10, %c0_11, %c0_12] : memref<1x16x128xf32, #tpu.memory_space<vmem>>, vector<1x16x128xf32>
    %19 = vector.shape_cast %18 : vector<1x16x128xf32> to vector<16x128xf32>
    %20 = arith.addf %19, %11 : vector<16x128xf32>
    %c0_13 = arith.constant 0 : index
    %c0_14 = arith.constant 0 : index
    %c0_15 = arith.constant 0 : index
    %21 = vector.load %arg4[%c0_13, %c0_14, %c0_15] : memref<1x16x128xf32, #tpu.memory_space<vmem>>, vector<1x16x128xf32>
    %22 = vector.shape_cast %21 : vector<1x16x128xf32> to vector<16x128xf32>
    %23 = vector.shape_cast %20 : vector<16x128xf32> to vector<1x16x128xf32>
    tpu.vector_store %arg4[%c0_13, %c0_14, %c0_15], %23 {strides = array<i32>} : memref<1x16x128xf32, #tpu.memory_space<vmem>>, vector<1x16x128xf32>,
    return
  }
  func.func @transform_0(%arg0: i32, %arg1: i32) -> (i32, i32, i32) {
    %c1_i32 = arith.constant 1 : i32
    %0 = arith.muli %arg0, %c1_i32 : i32
    %1 = arith.addi %0, %arg1 : i32
    %c0_i32 = arith.constant 0 : i32
    %c0_i32_0 = arith.constant 0 : i32
    %c0_i32_1 = arith.constant 0 : i32
    return %1, %c0_i32, %c0_i32_0 : i32, i32, i32
  }
  func.func @transform_1(%arg0: i32, %arg1: i32) -> (i32, i32, i32) {
    %c0_i32 = arith.constant 0 : i32
    %c0_i32_0 = arith.constant 0 : i32
    %c0_i32_1 = arith.constant 0 : i32
    return %arg0, %c0_i32, %c0_i32_0 : i32, i32, i32
  }
  func.func @transform_2(%arg0: i32, %arg1: i32) -> (i32, i32, i32) {
    %c0_i32 = arith.constant 0 : i32
    %c0_i32_0 = arith.constant 0 : i32
    %c0_i32_1 = arith.constant 0 : i32
    return %arg0, %c0_i32, %c0_i32_0 : i32, i32, i32
  }
}

</mosaic_0001>

<llo_original>
// kernel: tv_loss.1
$region0: #{tv_loss.1}
  #allocation0 [shape = 'u32[]', space=smem, size = 0x4, offset = 0x4, fixed_abs, tag = 'smem constant byte address 0x4 - core index']
  #allocation1 [shape = 'u32[72,128]{1,0:T(1,128)}', space=vmem, size = 0x9000, scoped, tag = 'internal scratch']
  %s0 = inlined_call_operand.vmem [shape: f32[1,16,128], index: 0, kind: input, shape index: {}]
  %s1 = inlined_call_operand.vmem [shape: f32[1,16,128], index: 1, kind: output, shape index: {0}]
  %s2 = inlined_call_operand.vmem [shape: f32[1,16,128], index: 2, kind: output, shape index: {1}]
  %3 = xla_tuple %s1, %s2
  %s4 = sld [smem:[#allocation0]]
  $region26: #{tv_loss.1} parent=0
    _
  %s6 = ssub.s32 1, %s4
  %s7 = scalar_select 0, %s6, %s4
  // Predicated region
  $region2: #{tv_loss.1} parent=0 // pred_check
    _
  $region3: #{tv_loss.1} parent=0 // pred_check_branch
    %9 = sbr.rel (0) target = $region5
  $region4: #{tv_loss.1} parent=0 // pred_region
    %s10 = sadd.s32 0, 0
    %p11 = scmp.lt.s32.totalorder %s10, 0
    %s12 = scalar_select %p11, %s10, 0
    %s13 = smul.addr %s12, 2
    %s14 = smul.addr %s13, 8
    %s15 = scalar_lea.vmem %s0, %s14
    %s16 = sadd.s32 0, 0
  $region5: #{tv_loss.1} parent=0 // pred_fallthru
    _
  %s17 = sadd.s32 0, 0
  %p18 = scmp.lt.s32.totalorder %s17, 0
  %s19 = scalar_select %p18, %s17, 0
  %s20 = smul.addr %s19, 2
  %s21 = smul.addr %s20, 8
  %s22 = scalar_lea.vmem %s0, %s21
  %s23 = sadd.s32 0, 0
  %p24 = scmp.lt.s32.totalorder %s23, 0
  %s25 = scalar_select %p24, %s23, 0
  %s26 = smul.addr %s25, 2
  %s27 = smul.addr %s26, 8
  %s28 = scalar_lea.vmem %s0, %s27
  %s29 = sadd.s32 0, 0
  %p30 = scmp.eq.s32.totalorder 0, 0
  // Predicated region
  $region6: #{tv_loss.1} parent=0 // pred_check
    %p31 = pneg %p30
  $region7: #{tv_loss.1} parent=0 // pred_check_branch
    %33 = sbr.rel (%p31) target = $region9
  $region8: #{tv_loss.1} parent=0 // pred_region
    %34 = vst [vmem:[%s1] sm:$0xff] 0.0
    %35 = vst [vmem:[%s1 + $0x8] sm:$0xff] 0.0
    %36 = vst [vmem:[%s2] sm:$0xff] 0.0
    %37 = vst [vmem:[%s2 + $0x8] sm:$0xff] 0.0
  $region9: #{tv_loss.1} parent=0 // pred_fallthru
    _
  %v38 = vld [vmem:[%s28] sm:$0xff]
  %v39 = vld [vmem:[%s28 + $0x8] sm:$0xff]
  %v40 = vrot.slane %v38, 1
  %v41 = vrot.slane %v39, 1
  %v42 = vlaneseq
  %v43 = vshrl.u32 %v42, 7
  %vm44 = vcmp.lt.s32.totalorder %v43, 7
  %v45 = vsel %vm44, %v40, %v41
  %v46 = vsel %vm44, %v41, %v40
  %v47 = vsub.f32 %v45, %v38
  %v48 = vsub.f32 %v46, %v39
  %49 = vrot.lane.b32.xlu0 %v38, 127
  %v50 = vpop.permute.xlu0 %49
  %51 = vrot.lane.b32.xlu0 %v39, 127
  %v52 = vpop.permute.xlu0 %51
  %v53 = vsub.f32 %v50, %v38
  %v54 = vsub.f32 %v52, %v39
  %v55 = vmul.f32 %v47, %v47
  %v56 = vmul.f32 %v48, %v48
  %v57 = vadd.f32 %v55, 0.0
  %v58 = vadd.f32 %v56, 0.0
  %v59 = vmul.f32 %v53, %v53
  %v60 = vmul.f32 %v54, %v54
  %v61 = vadd.f32 %v59, 0.0
  %v62 = vadd.f32 %v60, 0.0
  %v63 = vld [vmem:[%s1] sm:$0xff]
  %v64 = vld [vmem:[%s1 + $0x8] sm:$0xff]
  %v65 = vadd.f32 %v63, %v57
  %v66 = vadd.f32 %v64, %v58
  %67 = vst [vmem:[%s1] sm:$0xff] %v65
  %68 = vst [vmem:[%s1 + $0x8] sm:$0xff] %v66
  %v69 = vld [vmem:[%s2] sm:$0xff]
  %v70 = vld [vmem:[%s2 + $0x8] sm:$0xff]
  %v71 = vadd.f32 %v69, %v61
  %v72 = vadd.f32 %v70, %v62
  %73 = vst [vmem:[%s2] sm:$0xff] %v71
  %74 = vst [vmem:[%s2 + $0x8] sm:$0xff] %v72
  // Predicated region
  $region10: #{tv_loss.1} parent=0 // pred_check
    _
  $region11: #{tv_loss.1} parent=0 // pred_check_branch
    %76 = sbr.rel (0) target = $region13
  $region12: #{tv_loss.1} parent=0 // pred_region
    _
  $region13: #{tv_loss.1} parent=0 // pred_fallthru
    _
  // Predicated region
  $region14: #{tv_loss.1} parent=0 // pred_check
    _
  $region15: #{tv_loss.1} parent=0 // pred_check_branch
    %78 = sbr.rel (0) target = $region17
  $region16: #{tv_loss.1} parent=0 // pred_region
    _
  $region17: #{tv_loss.1} parent=0 // pred_fallthru
    _
  // Predicated region
  $region18: #{tv_loss.1} parent=0 // pred_check
    _
  $region19: #{tv_loss.1} parent=0 // pred_check_branch
    %80 = sbr.rel (0) target = $region21
  $region20: #{tv_loss.1} parent=0 // pred_region
    _
  $region21: #{tv_loss.1} parent=0 // pred_fallthru
    _
  // Predicated region
  $region22: #{tv_loss.1} parent=0 // pred_check
    _
  $region23: #{tv_loss.1} parent=0 // pred_check_branch
    %82 = sbr.rel (0) target = $region25
  $region24: #{tv_loss.1} parent=0 // pred_region
    _
  $region25: #{tv_loss.1} parent=0 // pred_fallthru
    _

</llo_original>
